<compile_context>
chip_gen: v7x
topology: tpu7x:2x2x1
jax: 0.10.0
libtpu: 0.0.40
codegen_flags: <defaults>
</compile_context>

<pallas_src>
import jax
import jax.numpy as jnp
from jax.experimental import pallas as pl
from jax.experimental.pallas import tpu as pltpu


def _copy_block_kernel(x_ref, o_ref):
    # x_ref: (ct, pt, L) input slab (re-DMA elided across the repeat axis)
    # o_ref: (ct, pt, L) one of the 6 replicated output slabs
    o_ref[...] = x_ref[...]


def _largest_divisor_leq(n, cap):
    cap = max(1, min(n, cap))
    best = 1
    for d in range(1, cap + 1):
        if n % d == 0:
            best = d
    return best


def _choose_spatial_layout(H, W):
    """Fold (H, W) into lane-dense (P, L) with L a multiple of 128 if possible."""
    HW = H * W
    if HW % 128 == 0:
        L = 128
        while L * 2 <= 2048 and HW % (L * 2) == 0:
            L *= 2
        return HW // L, L
    # Fallback: keep (H, W).  Last block dims remain full-extent so the
    # BlockSpec stays legal; stores may be masked for odd W.
    return H, W


def cat_repeat6(x):
    """Equivalent of Model.forward: out[:, j] = x[:, j % C], j in [0, 6*C)."""
    N, C, H, W = x.shape
    itemsize = jnp.dtype(x.dtype).itemsize

    P, L = _choose_spatial_layout(H, W)
    x2 = x.reshape(N, C, P, L)

    # ---- per-chip VMEM budget for the pipelined working set ----------------
    try:
        vmem_cap = int(pltpu.get_tpu_info().vmem_capacity_bytes)
    except Exception:
        vmem_cap = 64 * 1024 * 1024  # conservative (v7x per-TC)
    # Working budget for 2x(double-buffered in + out) blocks; capped so the
    # same choice is safe on v5e/v6e (128 MiB) and v7x (64 MiB per TC).
    budget = min(vmem_cap // 2, 32 * 1024 * 1024)

    # footprint(ct, pt) = 2 * (in_block + out_block) = 4 * ct * pt * L * itemsize
    unit = L * itemsize
    max_rows = max(1, budget // (4 * unit))  # max ct * pt

    if max_rows >= P:
        pt = P
        ct = _largest_divisor_leq(C, max_rows // P)
    else:
        # Spatial slab alone exceeds the budget: tile P instead (pt must be a
        # multiple of 8 to satisfy the (8, 128) block-shape rule).
        ct = 1
        cands = [d for d in range(8, P + 1, 8) if P % d == 0 and d <= max_rows]
        pt = max(cands) if cands else P

    footprint = 4 * ct * pt * L * itemsize
    vmem_limit = int(min(vmem_cap, max(footprint + (4 << 20), 16 << 20)))

    grid = (N, C // ct, P // pt, 6)  # repeat axis innermost -> input DMA elided

    out = pl.pallas_call(
        _copy_block_kernel,
        out_shape=jax.ShapeDtypeStruct((N, 6, C, P, L), x.dtype),
        grid=grid,
        in_specs=[
            pl.BlockSpec((None, ct, pt, L), lambda n, c, p, r: (n, c, p, 0)),
        ],
        out_specs=pl.BlockSpec(
            (None, None, ct, pt, L), lambda n, c, p, r: (n, r, c, p, 0)
        ),
        compiler_params=pltpu.CompilerParams(
            dimension_semantics=("parallel", "parallel", "parallel", "arbitrary"),
            vmem_limit_bytes=vmem_limit,
        ),
        cost_estimate=pl.CostEstimate(
            flops=0,
            transcendentals=0,
            bytes_accessed=7 * N * C * H * W * itemsize,  # 1 read + 6 writes
        ),
    )(x2)

    # (N, 6, C, P, L) -> (N, 6*C, H, W): contiguous reshape (metadata only);
    # out[:, r, c] = x[:, c]  =>  flat channel j = r*C + c  =>  out[:, j] = x[:, j % C].
    return out.reshape(N, 6 * C, H, W)


def reference(x):
    v1 = jnp.concatenate([x, x, x], axis=1)
    v2 = v1[:, 0:36028797018963970]   # no-op slice (bound >> size)
    v3 = v2[:, 0:38426849195166273]   # no-op slice
    v4 = jnp.concatenate([v1, v3], axis=1)
    return v4


if __name__ == "__main__":
    # Small shape consistent with the module's NCHW input (orig: 1x32x256x800).
    key = jax.random.PRNGKey(0)
    x = jax.random.normal(key, (2, 4, 16, 16), dtype=jnp.float32)

    out = jax.block_until_ready(cat_repeat6(x))
    ref = reference(x)

    assert out.shape == ref.shape, (out.shape, ref.shape)
    assert out.dtype == ref.dtype, (out.dtype, ref.dtype)
    assert jnp.array_equal(out, ref), "mismatch vs reference"

    print("KERNEL_OK")
</pallas_src>

<mosaic_0001>
module attributes {stable_mosaic.version = 11 : i64} {
  func.func @_copy_block_kernel(%arg0: i32, %arg1: i32, %arg2: i32, %arg3: i32, %arg4: memref<1x4x1x256xf32, #tpu.memory_space<vmem>>, %arg5: memref<1x1x4x1x256xf32, #tpu.memory_space<vmem>>) attributes {dimension_semantics = [#tpu.dimension_semantics<parallel>, #tpu.dimension_semantics<parallel>, #tpu.dimension_semantics<parallel>, #tpu.dimension_semantics<arbitrary>], iteration_bounds = array<i64: 2, 1, 1, 6>, scalar_prefetch = 0 : i64, scratch_operands = 0 : i64, tpu.core_type = #tpu.core_type<tc>, window_params = [{transform_indices = @transform_0, window_bounds = array<i64: 1, 4, 1, 256>}, {transform_indices = @transform_1, window_bounds = array<i64: 1, 1, 4, 1, 256>}]} {
    %c0 = arith.constant 0 : index
    %c0_0 = arith.constant 0 : index
    %c0_1 = arith.constant 0 : index
    %c0_2 = arith.constant 0 : index
    %0 = vector.load %arg4[%c0, %c0_0, %c0_1, %c0_2] : memref<1x4x1x256xf32, #tpu.memory_space<vmem>>, vector<1x4x1x256xf32>
    %1 = vector.shape_cast %0 : vector<1x4x1x256xf32> to vector<4x1x256xf32>
    %c0_3 = arith.constant 0 : index
    %c0_4 = arith.constant 0 : index
    %c0_5 = arith.constant 0 : index
    %c0_6 = arith.constant 0 : index
    %c0_7 = arith.constant 0 : index
    %2 = vector.load %arg5[%c0_3, %c0_4, %c0_5, %c0_6, %c0_7] : memref<1x1x4x1x256xf32, #tpu.memory_space<vmem>>, vector<1x1x4x1x256xf32>
    %3 = vector.shape_cast %2 : vector<1x1x4x1x256xf32> to vector<4x1x256xf32>
    %4 = vector.shape_cast %1 : vector<4x1x256xf32> to vector<1x1x4x1x256xf32>
    tpu.vector_store %arg5[%c0_3, %c0_4, %c0_5, %c0_6, %c0_7], %4 {strides = array<i32>} : memref<1x1x4x1x256xf32, #tpu.memory_space<vmem>>, vector<1x1x4x1x256xf32>,
    return
  }
  func.func @transform_0(%arg0: i32, %arg1: i32, %arg2: i32, %arg3: i32) -> (i32, i32, i32, i32) {
    %c0_i32 = arith.constant 0 : i32
    %c0_i32_0 = arith.constant 0 : i32
    return %arg0, %arg1, %arg2, %c0_i32 : i32, i32, i32, i32
  }
  func.func @transform_1(%arg0: i32, %arg1: i32, %arg2: i32, %arg3: i32) -> (i32, i32, i32, i32, i32) {
    %c0_i32 = arith.constant 0 : i32
    %c0_i32_0 = arith.constant 0 : i32
    return %arg0, %arg3, %arg1, %arg2, %c0_i32 : i32, i32, i32, i32, i32
  }
}

</mosaic_0001>

<llo_original>
// kernel: tpu_custom_call.1
$region0: #{tpu_custom_call.1}
  #allocation0 [shape = 'u32[]', space=smem, size = 0x4, offset = 0x4, fixed_abs, tag = 'smem constant byte address 0x4 - core index']
  #allocation1 [shape = 'u32[144,128]{1,0:T(1,128)}', space=vmem, size = 0x12000, scoped, tag = 'internal scratch']
  %s0 = inlined_call_operand.hbm [shape: f32[2,4,1,256], index: 0, kind: input, shape index: {}]
  %s1 = inlined_call_operand.hbm [shape: f32[2,6,4,1,256], index: 1, kind: output, shape index: {}]
  %s2 = sld [smem:[#allocation0]]
  $region41: #{tpu_custom_call.1} parent=0
    _
  %s4 = ssub.s32 1, %s2
  %s5 = scalar_select 0, %s4, %s2
  $region1: #{tpu_custom_call.1} parent=0
    #allocation2 [shape = 'u8[8192]{0}', space=vmem, size = 0x2000, scoped, tag = 'input window, operand 0']
    #allocation3 [shape = 's32[2]{0}', space=sflag, size = 0x8, scoped, tag = 'scoped memory for tpu_custom_call.1']
    #allocation4 [shape = 's32[2]{0}', space=sflag, size = 0x8, scoped, tag = 'scoped memory for tpu_custom_call.1']
    #allocation5 [shape = 'u8[8192]{0}', space=vmem, size = 0x2000, scoped, tag = 'output window, operand 0']
    %6 = vsyncpa [#allocation3], 0
    %s7 = scalar_lea.sflag [#allocation3], 1
    %8 = vsyncpa %s7, 0
    %9 = vsyncpa [#allocation4], 0
    %s10 = scalar_lea.sflag [#allocation4], 1
    %11 = vsyncpa %s10, 0
    loop: start=0, step=1, limit=14
    $region2: #{tpu_custom_call.1} parent=1 // loop_pre_header
      _
    $region3: #{tpu_custom_call.1} parent=1 // loop_header
      %s13 = sphi 0, %s17
      %p14 = scmp.ge.s32.totalorder %s13, 14
      %s20 = sphi 0, %s46
      %s21 = sphi 0, %s42
      %s22 = sphi 0, %s38
      %s23 = sphi 0, %s34
      %s24 = sphi 0, %s20
      %s25 = sphi 0, %s21
      %s26 = sphi 0, %s22
      %s27 = sphi 0, %s23
      %s28 = sphi 0, %s24
      %s29 = sphi 0, %s25
      %s30 = sphi 0, %s26
      %s31 = sphi 0, %s27
      %s53 = sphi 0, %s55
      %s56 = sphi 0, %s53
      %s57 = sphi 0, %s56
      %s73 = sphi 0, %s57
      %s85 = sphi 0, %s87
      %s88 = sphi 0, %s85
      %s89 = sphi 0, %s88
      %s105 = sphi 0, %s89
    $region4: #{tpu_custom_call.1} parent=1 // loop_header_branch
      %16 = sbr.rel (%p14) target = $region8
    $region5: #{tpu_custom_call.1} parent=1 // loop_body
      %s18 = ssub.s32 %s13, 1
      %s19 = ssub.s32 %s13, 2
      %s32 = sadd.s32 1, %s23
      %p33 = scmp.ge.s32.totalorder %s32, 6
      %s34 = scalar_select %p33, 0, %s32
      %s35 = sadd.s32 1, %s22
      %s36 = scalar_select %p33, %s35, %s22
      %p37 = scmp.ge.s32.totalorder %s36, 1
      %s38 = scalar_select %p37, 0, %s36
      %s39 = sadd.s32 1, %s21
      %s40 = scalar_select %p37, %s39, %s21
      %p41 = scmp.ge.s32.totalorder %s40, 1
      %s42 = scalar_select %p41, 0, %s40
      %s43 = sadd.s32 1, %s20
      %s44 = scalar_select %p41, %s43, %s20
      %p45 = scmp.ge.s32.totalorder %s44, 2
      %s46 = scalar_select %p45, 0, %s44
      %s47 = ssub.s32 %s20, %s46
      %s48 = ssub.s32 %s21, %s42
      %s49 = sor.u32 %s47, %s48
      %s50 = ssub.s32 %s22, %s38
      %s51 = sor.u32 %s49, %s50
      %p52 = scmp.eq.s32.totalorder %s51, 0
      %s54 = sadd.s32 %s53, 1
      %s55 = scalar_select %p52, %s53, %s54
      %p58 = pneg %p52
      %p59 = scmp.eq.s32.totalorder %s13, 11
      %p60 = por %p58, %p59
      %p61 = scmp.ne.s32.totalorder %s53, %s56
      %p62 = scmp.eq.s32.totalorder %s13, 0
      %p63 = por %p61, %p62
      %p64 = scmp.ne.s32.totalorder %s53, %s56
      %p65 = scmp.eq.s32.totalorder %s18, 11
      %p66 = por %p64, %p65
      %p67 = scmp.ne.s32.totalorder %s56, %s57
      %p68 = scmp.eq.s32.totalorder %s18, 0
      %p69 = por %p67, %p68
      %p70 = scmp.ne.s32.totalorder %s56, %s57
      %p71 = scmp.eq.s32.totalorder %s19, 11
      %p72 = por %p70, %p71
      %p74 = scmp.ne.s32.totalorder %s57, %s73
      %p75 = scmp.eq.s32.totalorder %s19, 0
      %p76 = por %p74, %p75
      %s77 = ssub.s32 %s20, %s46
      %s78 = ssub.s32 %s23, %s34
      %s79 = sor.u32 %s77, %s78
      %s80 = ssub.s32 %s21, %s42
      %s81 = sor.u32 %s79, %s80
      %s82 = ssub.s32 %s22, %s38
      %s83 = sor.u32 %s81, %s82
      %p84 = scmp.eq.s32.totalorder %s83, 0
      %s86 = sadd.s32 %s85, 1
      %s87 = scalar_select %p84, %s85, %s86
      %p90 = pneg %p84
      %p91 = scmp.eq.s32.totalorder %s13, 11
      %p92 = por %p90, %p91
      %p93 = scmp.ne.s32.totalorder %s85, %s88
      %p94 = scmp.eq.s32.totalorder %s13, 0
      %p95 = por %p93, %p94
      %p96 = scmp.ne.s32.totalorder %s85, %s88
      %p97 = scmp.eq.s32.totalorder %s18, 11
      %p98 = por %p96, %p97
      %p99 = scmp.ne.s32.totalorder %s88, %s89
      %p100 = scmp.eq.s32.totalorder %s18, 0
      %p101 = por %p99, %p100
      %p102 = scmp.ne.s32.totalorder %s88, %s89
      %p103 = scmp.eq.s32.totalorder %s19, 11
      %p104 = por %p102, %p103
      %p106 = scmp.ne.s32.totalorder %s89, %s105
      %p107 = scmp.eq.s32.totalorder %s19, 0
      %p108 = por %p106, %p107
      %p109 = scmp.le.s32.totalorder 1, %s13
      %p110 = scmp.lt.s32.totalorder %s13, 13
      %p111 = pnand %p109, %p110
      %p112 = pneg %p111
      // Predicated region
      $region9: #{tpu_custom_call.1} parent=5 // pred_check
        _
      $region10: #{tpu_custom_call.1} parent=5 // pred_check_branch
        %114 = sbr.rel (%p111) target = $region12
      $region11: #{tpu_custom_call.1} parent=5 // pred_region
        %s115 = ssub.s32 %s13, 1
      $region12: #{tpu_custom_call.1} parent=5 // pred_fallthru
        _
      %p116 = scmp.lt.s32.totalorder %s13, 12
      // Predicated region
      $region13: #{tpu_custom_call.1} parent=5 // pred_check
        %p117 = pneg %p116
      $region14: #{tpu_custom_call.1} parent=5 // pred_check_branch
        %119 = sbr.rel (%p117) target = $region16
      $region15: #{tpu_custom_call.1} parent=5 // pred_region
        // Predicated region
        $region17: #{tpu_custom_call.1} parent=15 // pred_check
          %p120 = pneg %p63
        $region18: #{tpu_custom_call.1} parent=15 // pred_check_branch
          %122 = sbr.rel (%p120) target = $region20
        $region19: #{tpu_custom_call.1} parent=15 // pred_region
          %s123 = sand.u32 %s53, 1
          %s124 = scalar_lea.sflag [#allocation3], %s123
          %s125 = sand.u32 %s53, 1
          %s126 = smul.addr %s125, 8
          %s127 = scalar_lea.vmem [#allocation2], %s126
          %s128 = smul.u32 4, %s21
          %s130 = ssub.s32 128, 128
          %131 = vsyncadd %s124, %s130
          %s132 = smul.addr %s22, 2
          %s133 = smul.addr %s128, 2
          %s134 = sadd.s32 %s132, %s133
          %s135 = smul.addr %s20, 8
          %s136 = sadd.s32 %s134, %s135
          %s137 = smul.addr %s136, 16
          %s138 = scalar_lea.hbm %s0, %s137
          %s139 = sshll.u32 %s127, 4
          %s140 = int_to_ptr.vmem [resolvable:$true] %s139
          %145 = dma.hbm_to_vmem [thread:$0]  %s138, 128, %s140, %s124, 32, 32, 2
        $region20: #{tpu_custom_call.1} parent=15 // pred_fallthru
          _
      $region16: #{tpu_custom_call.1} parent=5 // pred_fallthru
        _
      %p146 = scmp.le.s32.totalorder 1, %s13
      %p147 = scmp.lt.s32.totalorder %s13, 13
      %p148 = pnand %p146, %p147
      %p149 = pneg %p148
      // Predicated region
      $region21: #{tpu_custom_call.1} parent=5 // pred_check
        _
      $region22: #{tpu_custom_call.1} parent=5 // pred_check_branch
        %151 = sbr.rel (%p148) target = $region24
      $region23: #{tpu_custom_call.1} parent=5 // pred_region
        %s152 = ssub.s32 %s13, 1
        %s153 = sand.u32 %s56, 1
        %s154 = scalar_lea.sflag [#allocation3], %s153
        %s155 = sand.u32 %s56, 1
        %s156 = smul.addr %s155, 8
        %s157 = scalar_lea.vmem [#allocation2], %s156
        // Predicated region
        $region25: #{tpu_custom_call.1} parent=23 // pred_check
          %p158 = pneg %p69
        $region26: #{tpu_custom_call.1} parent=23 // pred_check_branch
          %160 = sbr.rel (%p158) target = $region28
        $region27: #{tpu_custom_call.1} parent=23 // pred_region
          %161 = dma.done %s154, 128
        $region28: #{tpu_custom_call.1} parent=23 // pred_fallthru
          _
        %s162 = sand.u32 %s56, 1
        %s163 = scalar_lea.sflag [#allocation3], %s162
        %s164 = sand.u32 %s56, 1
        %s165 = smul.addr %s164, 8
        %s166 = scalar_lea.vmem [#allocation2], %s165
        %p167 = pneg %p69
        %p168 = pneg %p66
        %p169 = pneg %p101
        %p170 = pneg %p98
        %s171 = sand.u32 %s88, 1
        %s172 = scalar_lea.sflag [#allocation4], %s171
        %s173 = sand.u32 %s88, 1
        %s174 = smul.addr %s173, 8
        %s175 = scalar_lea.vmem [#allocation5], %s174
        %s176 = smul.u32 4, %s25
        %s177 = smul.u32 4, %s25
        %v178 = vld [vmem:[%s157] sm:$0x3]
        %v179 = vld [vmem:[%s157 + $0x2] sm:$0x3]
        %v180 = vld [vmem:[%s157 + $0x4] sm:$0x3]
        %v181 = vld [vmem:[%s157 + $0x6] sm:$0x3]
        %v182 = vlaneseq
        %vm183 = vcmp.ge.s32.totalorder %v182, 0
        %vm184 = vcmp.lt.s32.totalorder %v182, 256
        %vm185 = vmand %vm183, %vm184
        %186 = vst.msk [vmem:[%s175] sm:$0x3] %vm185, %v178
        %187 = vst.msk [vmem:[%s175 + $0x2] sm:$0x3] %vm185, %v179
        %188 = vst.msk [vmem:[%s175 + $0x4] sm:$0x3] %vm185, %v180
        %189 = vst.msk [vmem:[%s175 + $0x6] sm:$0x3] %vm185, %v181
        %s190 = sand.u32 %s88, 1
        %s191 = scalar_lea.sflag [#allocation4], %s190
        %s192 = sand.u32 %s88, 1
        %s193 = smul.addr %s192, 8
        %s194 = scalar_lea.vmem [#allocation5], %s193
        // Predicated region
        $region29: #{tpu_custom_call.1} parent=23 // pred_check
          %p195 = pneg %p98
        $region30: #{tpu_custom_call.1} parent=23 // pred_check_branch
          %197 = sbr.rel (%p195) target = $region32
        $region31: #{tpu_custom_call.1} parent=23 // pred_region
          %s198 = smul.u32 4, %s25
          %s200 = ssub.s32 128, 128
          %201 = vsyncadd %s191, %s200
          %s202 = smul.addr %s26, 2
          %s203 = smul.addr %s198, 2
          %s204 = sadd.s32 %s202, %s203
          %s205 = smul.addr %s27, 8
          %s206 = sadd.s32 %s204, %s205
          %s207 = smul.addr %s24, 48
          %s208 = sadd.s32 %s206, %s207
          %s209 = smul.addr %s208, 16
          %s210 = scalar_lea.hbm %s1, %s209
          %s211 = sshll.u32 %s194, 4
          %s212 = int_to_ptr.vmem [resolvable:$true] %s211
          %217 = dma.vmem_to_hbm [thread:$0]  %s212, 128, %s210, %s191, 32, 32, 2
        $region32: #{tpu_custom_call.1} parent=23 // pred_fallthru
          _
      $region24: #{tpu_custom_call.1} parent=5 // pred_fallthru
        _
      %p218 = scmp.le.s32.totalorder 2, %s13
      // Predicated region
      $region33: #{tpu_custom_call.1} parent=5 // pred_check
        %p219 = pneg %p218
      $region34: #{tpu_custom_call.1} parent=5 // pred_check_branch
        %221 = sbr.rel (%p219) target = $region36
      $region35: #{tpu_custom_call.1} parent=5 // pred_region
        %s222 = ssub.s32 %s13, 2
        // Predicated region
        $region37: #{tpu_custom_call.1} parent=35 // pred_check
          %p223 = pneg %p104
        $region38: #{tpu_custom_call.1} parent=35 // pred_check_branch
          %225 = sbr.rel (%p223) target = $region40
        $region39: #{tpu_custom_call.1} parent=35 // pred_region
          %s226 = sand.u32 %s89, 1
          %s227 = scalar_lea.sflag [#allocation4], %s226
          %s228 = sand.u32 %s89, 1
          %s229 = smul.addr %s228, 8
          %s230 = scalar_lea.vmem [#allocation5], %s229
          %231 = dma.done %s227, 128
        $region40: #{tpu_custom_call.1} parent=35 // pred_fallthru
          _
      $region36: #{tpu_custom_call.1} parent=5 // pred_fallthru
        _
    $region6: #{tpu_custom_call.1} parent=1 // loop_footer
      %s17 = sadd.s32 1, %s13
    $region7: #{tpu_custom_call.1} parent=1 // loop_footer_branch
      %12 = sbr.rel target = $region3
    $region8: #{tpu_custom_call.1} parent=1 // loop_exit
      _
    %232 = vsyncpa [#allocation3], 1
    %s233 = scalar_lea.sflag [#allocation3], 1
    %234 = vsyncpa %s233, 1
    %235 = vsyncpa [#allocation4], 1
    %s236 = scalar_lea.sflag [#allocation4], 1
    %237 = vsyncpa %s236, 1

</llo_original>
